<compile_context>
chip_gen: v6e
topology: v6e:2x2x1
jax: 0.10.0
libtpu: 0.0.40
codegen_flags: <defaults>
</compile_context>

<pallas_src>
import functools

import jax
import jax.numpy as jnp
from jax import lax
from jax.experimental import pallas as pl
from jax.experimental.pallas import tpu as pltpu

_LANES = 128
_SUBLANES = 8
# ~4 MiB of f32-equivalent rows per input tile per pipeline buffer.
_MAX_BLOCK_ROWS = 8192


def _round_up(v, m):
    return ((v + m - 1) // m) * m


def _num_tensorcores() -> int:
    """2 on dual-TensorCore chips (v7x-class); 1 on single-TC v5e/v6e.

    Defaults to 2 when detection fails: a 2-way "parallel" split is harmless
    (merely serialised) on a single TensorCore.
    """
    try:
        kind = jax.devices()[0].device_kind.lower()
    except Exception:
        return 2
    if "lite" in kind or "v5e" in kind or "v6e" in kind:
        return 1
    return 2


def _mse_partial_kernel(x_ref, y_ref, o_ref, *, rows_valid, block_rows,
                        steps_per_core, needs_mask):
    """Accumulates per-core partial sums of squared differences into o_ref.

    Grid = (num_cores, steps_per_core); axis 0 is "parallel" (megacore),
    axis 1 is the "arbitrary" reduction axis carried by the resident
    (8, 128) output block (its index_map ignores k).
    """
    c = pl.program_id(0)
    k = pl.program_id(1)

    @pl.when(k == 0)
    def _():
        o_ref[...] = jnp.zeros_like(o_ref)

    def accumulate(masked):
        # In-kernel f32 upcast; temporaries are budgeted in vmem_limit_bytes.
        d = x_ref[...].astype(jnp.float32) - y_ref[...].astype(jnp.float32)
        if masked:
            # NOTE: must use the UNCLAMPED block index so the clamped
            # duplicate step (odd block count on a 2-core split) masks to
            # exactly zero, and the mask must be applied BEFORE squaring so
            # NaN/Inf garbage in the out-of-bounds tail cannot propagate.
            base_row = (c * steps_per_core + k) * block_rows
            row_ids = base_row + lax.broadcasted_iota(
                jnp.int32, (block_rows, _LANES), 0)
            d = jnp.where(row_ids < rows_valid, d, 0.0)
        dd = d * d
        # Leading-axis sum of (block_rows//8, 8, 128): pure VPU vreg adds,
        # no cross-lane XLU work inside the hot loop.
        o_ref[...] += dd.reshape(-1, _SUBLANES, _LANES).sum(axis=0)

    if needs_mask:
        # Only the block(s) straddling rows_valid pay the iota/cmp/select.
        block_start = (c * steps_per_core + k) * block_rows
        straddles_tail = block_start + block_rows > rows_valid

        @pl.when(straddles_tail)
        def _():
            accumulate(True)

        @pl.when(jnp.logical_not(straddles_tail))
        def _():
            accumulate(False)
    else:
        accumulate(False)


def content_loss(x, y):
    """Pallas TPU implementation of nn.MSELoss()(x, y) (mean over all elems)."""
    assert x.shape == y.shape, "MSELoss requires matching shapes"
    n = x.size

    xf = x.reshape(-1)
    yf = y.reshape(-1)

    if n % _LANES != 0:
        # TODO(synk): rare ragged case (numel not a multiple of 128) still
        # pays an O(N) pad copy; a manual-DMA (memory_space=pl.ANY) path with
        # a lane mask on the final partial row would remove it.
        pad = _LANES - n % _LANES
        xf = jnp.pad(xf, (0, pad))
        yf = jnp.pad(yf, (0, pad))

    rows = xf.size // _LANES
    x2 = xf.reshape(rows, _LANES)   # free layout view for contiguous inputs
    y2 = yf.reshape(rows, _LANES)

    # Block rows: multiple of 8 (legal even if it overhangs a short array;
    # the overhang is masked in-kernel), capped at ~4 MiB f32 per input tile.
    block_rows = min(_MAX_BLOCK_ROWS, _round_up(rows, _SUBLANES))
    total_blocks = pl.cdiv(rows, block_rows)

    # Split row-blocks over both TensorCores only on dual-TC chips.
    num_cores = _num_tensorcores() if total_blocks >= 2 else 1
    steps_per_core = pl.cdiv(total_blocks, num_cores)
    last_block = total_blocks - 1

    if num_cores * steps_per_core == total_blocks:
        def in_map(c, k):
            return (c * steps_per_core + k, 0)
    else:
        def in_map(c, k):
            # Odd block count: clamp the trailing (fully masked) step of the
            # second core back onto the last valid block.
            return (jnp.minimum(c * steps_per_core + k, last_block), 0)

    # Mask only needed if the covered row range exceeds the real row count
    # (partial edge block and/or clamped duplicate step).
    needs_mask = num_cores * steps_per_core * block_rows != rows

    # Explicit VMEM budget: 2 inputs x 2 pipeline buffers + f32 temporaries
    # (x_f32, y_f32, d, dd worst case) + slack; capped at 48 MiB so it stays
    # inside v7x's 64 MiB physical VMEM, floored at 32 MiB for safety.
    in_tile_bytes = block_rows * _LANES * (x2.dtype.itemsize + y2.dtype.itemsize)
    tmp_bytes = 4 * block_rows * _LANES * 4
    vmem_needed = 2 * in_tile_bytes + tmp_bytes + (4 << 20)
    vmem_limit_bytes = int(min(max(vmem_needed, 32 << 20), 48 << 20))

    kernel = functools.partial(
        _mse_partial_kernel,
        rows_valid=rows,
        block_rows=block_rows,
        steps_per_core=steps_per_core,
        needs_mask=needs_mask,
    )

    partials = pl.pallas_call(
        kernel,
        out_shape=jax.ShapeDtypeStruct((num_cores * _SUBLANES, _LANES),
                                       jnp.float32),
        grid_spec=pltpu.PrefetchScalarGridSpec(
            num_scalar_prefetch=0,
            grid=(num_cores, steps_per_core),
            in_specs=[
                pl.BlockSpec((block_rows, _LANES), in_map),
                pl.BlockSpec((block_rows, _LANES), in_map),
            ],
            # Lane-dense (8,128) per-core partial-sum block; index_map ignores
            # the reduction axis so the block stays VMEM-resident (accumulator).
            out_specs=pl.BlockSpec((_SUBLANES, _LANES), lambda c, k: (c, 0)),
        ),
        compiler_params=pltpu.CompilerParams(
            dimension_semantics=("parallel", "arbitrary"),
            vmem_limit_bytes=vmem_limit_bytes,
        ),
    )(x2, y2)

    # Tiny (num_cores*8, 128) cross-lane reduce + mean done outside the kernel.
    return jnp.sum(partials) / jnp.float32(n)


class ContentLoss:
    """Drop-in analogue of the PyTorch module: loss = mean((x - y)**2)."""

    def __call__(self, x, y):
        return content_loss(x, y)


if __name__ == "__main__":
    key = jax.random.PRNGKey(0)
    kx, ky = jax.random.split(key)
    # NCHW, matching the conv-feature-map convention of the PyTorch module.
    x = jax.random.normal(kx, (2, 4, 16, 16), dtype=jnp.float32)
    y = jax.random.normal(ky, (2, 4, 16, 16), dtype=jnp.float32)

    loss = ContentLoss()(x, y)
    jax.block_until_ready(loss)

    # Sanity check against plain-JAX reference.
    ref = jnp.mean((x - y) ** 2)
    assert jnp.allclose(loss, ref, rtol=1e-5, atol=1e-6), (loss, ref)

    print("KERNEL_OK")
</pallas_src>

<mosaic_0001>
module attributes {stable_mosaic.version = 11 : i64} {
  func.func @_mse_partial_kernel(%arg0: i32, %arg1: i32, %arg2: memref<16x128xf32, #tpu.memory_space<vmem>>, %arg3: memref<16x128xf32, #tpu.memory_space<vmem>>, %arg4: memref<8x128xf32, #tpu.memory_space<vmem>>) attributes {dimension_semantics = [#tpu.dimension_semantics<parallel>, #tpu.dimension_semantics<arbitrary>], iteration_bounds = array<i64: 1, 1>, scalar_prefetch = 0 : i64, scratch_operands = 0 : i64, tpu.core_type = #tpu.core_type<tc>, window_params = [{transform_indices = @transform_0, window_bounds = array<i64: 16, 128>}, {transform_indices = @transform_1, window_bounds = array<i64: 16, 128>}, {transform_indices = @transform_2, window_bounds = array<i64: 8, 128>}]} {
    %c0_i32 = arith.constant 0 : i32
    %0 = arith.cmpi eq, %arg1, %c0_i32 : i32
    %1 = arith.extui %0 : i1 to i32
    %c0_i32_0 = arith.constant 0 : i32
    %2 = arith.cmpi ne, %1, %c0_i32_0 : i32
    scf.if %2 {
      %cst_8 = arith.constant 0.000000e+00 : f32
      %12 = vector.broadcast %cst_8 : f32 to vector<8x128xf32>
      %c0_9 = arith.constant 0 : index
      %c0_10 = arith.constant 0 : index
      %13 = vector.load %arg4[%c0_9, %c0_10] : memref<8x128xf32, #tpu.memory_space<vmem>>, vector<8x128xf32>
      tpu.vector_store %arg4[%c0_9, %c0_10], %12 {strides = array<i32>} : memref<8x128xf32, #tpu.memory_space<vmem>>, vector<8x128xf32>,
    } else {
    }
    %c0 = arith.constant 0 : index
    %c0_1 = arith.constant 0 : index
    %3 = vector.load %arg2[%c0, %c0_1] : memref<16x128xf32, #tpu.memory_space<vmem>>, vector<16x128xf32>
    %c0_2 = arith.constant 0 : index
    %c0_3 = arith.constant 0 : index
    %4 = vector.load %arg3[%c0_2, %c0_3] : memref<16x128xf32, #tpu.memory_space<vmem>>, vector<16x128xf32>
    %5 = arith.subf %3, %4 : vector<16x128xf32>
    %6 = arith.mulf %5, %5 : vector<16x128xf32>
    %c0_4 = arith.constant 0 : index
    %c0_5 = arith.constant 0 : index
    %7 = vector.load %arg4[%c0_4, %c0_5] : memref<8x128xf32, #tpu.memory_space<vmem>>, vector<8x128xf32>
    %8 = vector.shape_cast %6 : vector<16x128xf32> to vector<2x8x128xf32>
    %cst = arith.constant dense<0.000000e+00> : vector<8x128xf32>
    %9 = vector.multi_reduction <add>, %8, %cst [0] : vector<2x8x128xf32> to vector<8x128xf32>
    %10 = arith.addf %7, %9 : vector<8x128xf32>
    %c0_6 = arith.constant 0 : index
    %c0_7 = arith.constant 0 : index
    %11 = vector.load %arg4[%c0_6, %c0_7] : memref<8x128xf32, #tpu.memory_space<vmem>>, vector<8x128xf32>
    tpu.vector_store %arg4[%c0_6, %c0_7], %10 {strides = array<i32>} : memref<8x128xf32, #tpu.memory_space<vmem>>, vector<8x128xf32>,
    return
  }
  func.func @transform_0(%arg0: i32, %arg1: i32) -> (i32, i32) {
    %c1_i32 = arith.constant 1 : i32
    %0 = arith.muli %arg0, %c1_i32 : i32
    %1 = arith.addi %0, %arg1 : i32
    %c0_i32 = arith.constant 0 : i32
    %c0_i32_0 = arith.constant 0 : i32
    return %1, %c0_i32 : i32, i32
  }
  func.func @transform_1(%arg0: i32, %arg1: i32) -> (i32, i32) {
    %c1_i32 = arith.constant 1 : i32
    %0 = arith.muli %arg0, %c1_i32 : i32
    %1 = arith.addi %0, %arg1 : i32
    %c0_i32 = arith.constant 0 : i32
    %c0_i32_0 = arith.constant 0 : i32
    return %1, %c0_i32 : i32, i32
  }
  func.func @transform_2(%arg0: i32, %arg1: i32) -> (i32, i32) {
    %c0_i32 = arith.constant 0 : i32
    %c0_i32_0 = arith.constant 0 : i32
    return %arg0, %c0_i32 : i32, i32
  }
}

</mosaic_0001>

<llo_original>
// kernel: tpu_custom_call.1
$region0: #{tpu_custom_call.1}
  #allocation0 [shape = 'u32[]', space=smem, size = 0x4, offset = 0x4, fixed_abs, tag = 'smem constant byte address 0x4 - core index']
  #allocation1 [shape = 'u32[144,128]{1,0:T(1,128)}', space=vmem, size = 0x12000, scoped, tag = 'internal scratch']
  %s0 = inlined_call_operand.hbm [shape: f32[16,128], index: 0, kind: input, shape index: {}]
  %s1 = inlined_call_operand.hbm [shape: f32[16,128], index: 1, kind: input, shape index: {}]
  %s2 = inlined_call_operand.hbm [shape: f32[8,128], index: 2, kind: output, shape index: {}]
  %s3 = sld [smem:[#allocation0]]
  $region30: #{tpu_custom_call.1} parent=0
    _
  %s5 = ssub.s32 1, %s3
  %s6 = scalar_select 0, %s5, %s3
  $region1: #{tpu_custom_call.1} parent=0
    #allocation2 [shape = 'u8[8192]{0}', space=vmem, size = 0x2000, scoped, tag = 'input window, operand 0, single buffered']
    #allocation3 [shape = 's32[1]{0}', space=sflag, size = 0x4, scoped, tag = 'scoped memory for tpu_custom_call.1']
    #allocation4 [shape = 's32[1]{0}', space=sflag, size = 0x4, scoped, tag = 'scoped memory for tpu_custom_call.1']
    #allocation5 [shape = 'u8[8192]{0}', space=vmem, size = 0x2000, scoped, tag = 'input window, operand 1, single buffered']
    #allocation6 [shape = 's32[1]{0}', space=sflag, size = 0x4, scoped, tag = 'scoped memory for tpu_custom_call.1']
    #allocation7 [shape = 'u8[4096]{0}', space=vmem, size = 0x1000, scoped, tag = 'output window, operand 0, single buffered']
    %7 = vsyncpa [#allocation3], 0
    %8 = vsyncpa [#allocation6], 0
    %9 = vsyncpa [#allocation4], 0
    // Predicated region
    $region2: #{tpu_custom_call.1} parent=1 // pred_check
      _
    $region3: #{tpu_custom_call.1} parent=1 // pred_check_branch
      %11 = sbr.rel (0) target = $region5
    $region4: #{tpu_custom_call.1} parent=1 // pred_region
      %s12 = sadd.s32 0, 0
      %s13 = smul.u32 2, %s12
      %s15 = ssub.s32 256, 256
      %16 = vsyncadd [#allocation3], %s15
      %s17 = smul.addr %s13, 128
      %s18 = scalar_lea.hbm %s0, %s17
      %s19 = sshll.u32 [#allocation2], 4
      %s20 = int_to_ptr.vmem [resolvable:$true] %s19
      %25 = dma.hbm_to_vmem [thread:$0]  %s18, 256, %s20, [#allocation3], 128, 128, 8
    $region5: #{tpu_custom_call.1} parent=1 // pred_fallthru
      _
    // Predicated region
    $region6: #{tpu_custom_call.1} parent=1 // pred_check
      _
    $region7: #{tpu_custom_call.1} parent=1 // pred_check_branch
      %27 = sbr.rel (0) target = $region9
    $region8: #{tpu_custom_call.1} parent=1 // pred_region
      %s28 = sadd.s32 0, 0
      %s29 = smul.u32 2, %s28
      %s31 = ssub.s32 256, 256
      %32 = vsyncadd [#allocation6], %s31
      %s33 = smul.addr %s29, 128
      %s34 = scalar_lea.hbm %s1, %s33
      %s35 = sshll.u32 [#allocation5], 4
      %s36 = int_to_ptr.vmem [resolvable:$true] %s35
      %41 = dma.hbm_to_vmem [thread:$0]  %s34, 256, %s36, [#allocation6], 128, 128, 8
    $region9: #{tpu_custom_call.1} parent=1 // pred_fallthru
      _
    // Predicated region
    $region10: #{tpu_custom_call.1} parent=1 // pred_check
      _
    $region11: #{tpu_custom_call.1} parent=1 // pred_check_branch
      %43 = sbr.rel (0) target = $region13
    $region12: #{tpu_custom_call.1} parent=1 // pred_region
      %44 = dma.done [#allocation3], 256
    $region13: #{tpu_custom_call.1} parent=1 // pred_fallthru
      _
    // Predicated region
    $region14: #{tpu_custom_call.1} parent=1 // pred_check
      _
    $region15: #{tpu_custom_call.1} parent=1 // pred_check_branch
      %46 = sbr.rel (0) target = $region17
    $region16: #{tpu_custom_call.1} parent=1 // pred_region
      %47 = dma.done [#allocation6], 256
    $region17: #{tpu_custom_call.1} parent=1 // pred_fallthru
      _
    %s48 = sadd.s32 0, 0
    %s49 = smul.u32 2, %s48
    %s50 = sadd.s32 0, 0
    %s51 = smul.u32 2, %s50
    %p52 = scmp.eq.s32.totalorder 0, 0
    // Predicated region
    $region18: #{tpu_custom_call.1} parent=1 // pred_check
      %p53 = pneg %p52
    $region19: #{tpu_custom_call.1} parent=1 // pred_check_branch
      %55 = sbr.rel (%p53) target = $region21
    $region20: #{tpu_custom_call.1} parent=1 // pred_region
      %56 = vst [vmem:[#allocation7] sm:$0xff] 0.0
    $region21: #{tpu_custom_call.1} parent=1 // pred_fallthru
      _
    %v57 = vld [vmem:[#allocation2] sm:$0xff]
    %v58 = vld [vmem:[#allocation2 + $0x8] sm:$0xff]
    %v59 = vld [vmem:[#allocation5] sm:$0xff]
    %v60 = vld [vmem:[#allocation5 + $0x8] sm:$0xff]
    %v61 = vsub.f32 %v57, %v59
    %v62 = vsub.f32 %v58, %v60
    %v63 = vmul.f32 %v61, %v61
    %v64 = vmul.f32 %v62, %v62
    %v65 = vld [vmem:[#allocation7] sm:$0xff]
    %v66 = vadd.f32 %v63, %v64
    %v67 = vadd.f32 %v65, %v66
    %68 = vst [vmem:[#allocation7] sm:$0xff] %v67
    // Predicated region
    $region22: #{tpu_custom_call.1} parent=1 // pred_check
      _
    $region23: #{tpu_custom_call.1} parent=1 // pred_check_branch
      %70 = sbr.rel (0) target = $region25
    $region24: #{tpu_custom_call.1} parent=1 // pred_region
      %s72 = ssub.s32 128, 128
      %73 = vsyncadd [#allocation4], %s72
      %s75 = sshll.u32 [#allocation7], 4
      %s76 = int_to_ptr.vmem [resolvable:$true] %s75
      %78 = dma.vmem_to_hbm [thread:$0]  %s76, 128, %s2, [#allocation4]
    $region25: #{tpu_custom_call.1} parent=1 // pred_fallthru
      _
    // Predicated region
    $region26: #{tpu_custom_call.1} parent=1 // pred_check
      _
    $region27: #{tpu_custom_call.1} parent=1 // pred_check_branch
      %80 = sbr.rel (0) target = $region29
    $region28: #{tpu_custom_call.1} parent=1 // pred_region
      %81 = dma.done [#allocation4], 128
    $region29: #{tpu_custom_call.1} parent=1 // pred_fallthru
      _
    %82 = vsyncpa [#allocation3], 1
    %83 = vsyncpa [#allocation6], 1
    %84 = vsyncpa [#allocation4], 1

</llo_original>
